<compile_context>
chip_gen: v5e
topology: v5e:2x2
jax: 0.10.0
libtpu: 0.0.40
codegen_flags: <defaults>
</compile_context>

<pallas_src>
import jax
import jax.numpy as jnp
from jax.experimental import pallas as pl
from jax.experimental.pallas import tpu as pltpu

_LANE = 128
_SUBLANE = 8


def _user_encoder_kernel(len_ref, x_ref, wblk_ref, bias_ref, qseg_ref,
                         eexp_ref, segsum_ref, o_ref):
    """One grid step == one tile of TB batch elements.

    len_ref    : (TB, 1)     int32 clicked_news_length
    x_ref      : (TB, N*D)   lane-dense clicked news vectors (native dtype)
    wblk_ref   : (N*D, N*Q)  block-diagonal W^T (input dtype)
    bias_ref   : (1, N*Q)    bias tiled N times (f32)
    qseg_ref   : (N*Q, N)    query vector embedded in a 0/1 segment matrix (f32)
    eexp_ref   : (N, N*D)    0/1 segment-expansion matrix (input dtype)
    segsum_ref : (N*D, D)    0/1 segment-sum matrix (input dtype)
    o_ref      : (TB, D)     user vectors for this tile
    """
    tb = x_ref.shape[0]
    n = qseg_ref.shape[1]
    cdt = x_ref.dtype

    # ---- projection: ONE (TB, N*D) x (N*D, N*Q) MXU matmul ----------------
    h = jnp.dot(x_ref[...], wblk_ref[...],
                preferred_element_type=jnp.float32)          # (TB, N*Q) f32
    temp = jnp.tanh(h + bias_ref[...])                       # (TB, N*Q) f32 (EUP)

    # ---- attention logits: per-item segment reduce via one matmul ---------
    scores = jnp.dot(temp, qseg_ref[...],
                     preferred_element_type=jnp.float32)     # (TB, N) f32

    # ---- mask positions >= clicked_news_length (-1e9, not -inf, so that
    #      length==0 / padded rows softmax to a uniform average, not NaN) ---
    pos = jax.lax.broadcasted_iota(jnp.int32, (tb, n), 1)
    scores = jnp.where(pos < len_ref[...], scores, jnp.float32(-1e9))

    # ---- softmax over the clicked-news axis (denominator folded at end) ---
    m = jnp.max(scores, axis=-1, keepdims=True)              # (TB, 1)
    e = jnp.exp(scores - m)                                  # (TB, N)
    denom = jnp.sum(e, axis=-1, keepdims=True)               # (TB, 1)

    # ---- weighted sum without per-batch rank-1 matmuls --------------------
    #   (TB,N) x (N,N*D) -> expand weights over each D-lane segment
    #   * x elementwise, then (TB,N*D) x (N*D,D) segment-sum -> (TB,D)
    e_exp = jnp.dot(e.astype(cdt), eexp_ref[...],
                    preferred_element_type=cdt)              # (TB, N*D)
    weighted = x_ref[...] * e_exp                            # (TB, N*D)
    acc = jnp.dot(weighted, segsum_ref[...],
                  preferred_element_type=jnp.float32)        # (TB, D) f32

    inv = pl.reciprocal(denom, approx=False)                 # exact; cost hidden here
    o_ref[...] = (acc * inv).astype(o_ref.dtype)


def _lane_pad(c):
    return max(_LANE, ((c + _LANE - 1) // _LANE) * _LANE)


def _plan_tiling(B, N, D, Q, itemsize, batch_tile):
    """Pick batch_tile + vmem_limit_bytes from explicit live-VMEM accounting."""
    nd, nq = N * D, N * Q
    f32 = 4
    # conservative live bytes per batch row within one grid step (lane-padded)
    per_row = (
        2 * _lane_pad(nd) * itemsize               # double-buffered x tile
        + 2 * _lane_pad(1) * f32                   # double-buffered int32 lengths
        + _lane_pad(nq) * f32                      # temp (f32)
        + 2 * _lane_pad(N) * f32                   # scores / e (f32)
        + 2 * _lane_pad(nd) * max(itemsize, f32)   # e_exp + weighted
        + _lane_pad(D) * f32                       # acc (f32)
        + 2 * _lane_pad(D) * itemsize              # double-buffered output tile
    )
    # resident weights (double-buffered, lane-padded, generous)
    resident = 2 * (
        nd * _lane_pad(nq) * itemsize              # W_blk
        + _lane_pad(nq) * f32                      # bias
        + nq * _lane_pad(N) * f32                  # q segment matrix
        + N * _lane_pad(nd) * itemsize             # e-expansion matrix
        + nd * _lane_pad(D) * itemsize             # segment-sum matrix
    )

    if batch_tile is None:
        target = 24 * 1024 * 1024                  # live-VMEM target; safe on v7x (64 MiB/TC)
        batch_tile = max(_SUBLANE, min(4096, (target - resident) // per_row))
        batch_tile = (batch_tile // _SUBLANE) * _SUBLANE

    if batch_tile >= B:
        if B >= 2 * _SUBLANE:
            # keep >= 2 grid steps so "parallel" has something to shard (v7x 2 TCs)
            batch_tile = max(_SUBLANE, (((B + 1) // 2) // _SUBLANE) * _SUBLANE)
        else:
            batch_tile = B                         # single-step case (tiny B)
    else:
        batch_tile = max(_SUBLANE, (batch_tile // _SUBLANE) * _SUBLANE)

    est = per_row * batch_tile + resident
    vmem_limit = int(min(48 * 1024 * 1024,
                         max(16 * 1024 * 1024, int(1.5 * est) + (2 << 20))))
    return batch_tile, vmem_limit


def user_encoder_forward(clicked_news_vector, clicked_news_length, w, b, q,
                         *, batch_tile=None):
    """clicked_news_vector: (B, N, D) f32 or bf16
       clicked_news_length: (B,) int
       w: (Q, D) linear weight, b: (Q,) bias, q: (Q,) attention query vector.
       Returns (B, D) user vectors (same dtype as clicked_news_vector)."""
    x = jnp.asarray(clicked_news_vector)                     # keep native dtype
    lengths = jnp.asarray(clicked_news_length, jnp.int32)
    B, N, D = x.shape
    Q = jnp.asarray(q).shape[0]
    ND, NQ = N * D, N * Q
    cdt = x.dtype
    itemsize = jnp.dtype(cdt).itemsize

    batch_tile, vmem_limit = _plan_tiling(B, N, D, Q, itemsize, batch_tile)
    B_pad = ((B + batch_tile - 1) // batch_tile) * batch_tile

    # lane-dense streamed layout: (B, N*D); row-major so this reshape is free
    x_flat = x.reshape(B, ND)
    if B_pad != B:
        # padded rows: zero vectors + length 0 -> zero output, sliced off below
        x_flat = jnp.pad(x_flat, ((0, B_pad - B), (0, 0)))
        lengths = jnp.pad(lengths, ((0, B_pad - B),))
    lens_2d = lengths.reshape(B_pad, 1)

    # ---- resident weights; pre-cast to the input dtype (no in-kernel cast,
    #      MXU stays on its native bf16 path when x is bf16) -----------------
    w_t = jnp.asarray(w, jnp.float32).T                      # (D, Q)
    eye_n = jnp.eye(N, dtype=jnp.float32)
    w_blk = jnp.kron(eye_n, w_t).astype(cdt)                 # (N*D, N*Q) block-diag W^T
    bias_blk = jnp.tile(jnp.asarray(b, jnp.float32).reshape(1, Q), (1, N))   # (1, N*Q)
    q_seg = jnp.kron(eye_n, jnp.asarray(q, jnp.float32).reshape(Q, 1))       # (N*Q, N)
    e_expand = jnp.kron(eye_n, jnp.ones((1, D), jnp.float32)).astype(cdt)    # (N, N*D)
    seg_sum = jnp.kron(jnp.ones((N, 1), jnp.float32),
                       jnp.eye(D, dtype=jnp.float32)).astype(cdt)            # (N*D, D)

    grid_spec = pltpu.PrefetchScalarGridSpec(
        num_scalar_prefetch=0,
        grid=(B_pad // batch_tile,),
        in_specs=[
            pl.BlockSpec((batch_tile, 1), lambda i: (i, 0)),     # lengths
            pl.BlockSpec((batch_tile, ND), lambda i: (i, 0)),    # x (lane-dense)
            pl.BlockSpec((ND, NQ), lambda i: (0, 0)),            # W_blk (resident)
            pl.BlockSpec((1, NQ), lambda i: (0, 0)),             # bias (resident)
            pl.BlockSpec((NQ, N), lambda i: (0, 0)),             # q segment matrix
            pl.BlockSpec((N, ND), lambda i: (0, 0)),             # e-expansion matrix
            pl.BlockSpec((ND, D), lambda i: (0, 0)),             # segment-sum matrix
        ],
        out_specs=pl.BlockSpec((batch_tile, D), lambda i: (i, 0)),
    )

    out = pl.pallas_call(
        _user_encoder_kernel,
        out_shape=jax.ShapeDtypeStruct((B_pad, D), cdt),
        grid_spec=grid_spec,
        compiler_params=pltpu.CompilerParams(
            dimension_semantics=("parallel",),    # independent batch tiles
            vmem_limit_bytes=vmem_limit,
        ),
    )(lens_2d, x_flat, w_blk, bias_blk, q_seg, e_expand, seg_sum)

    return out[:B]


def user_encoder_reference(clicked_news_vector, clicked_news_length, w, b, q):
    """Pure-JAX reference mirroring the PyTorch AdditiveAttention."""
    x = clicked_news_vector.astype(jnp.float32)               # (B, N, D)
    temp = jnp.tanh(jnp.einsum("bnd,qd->bnq", x, w) + b)      # (B, N, Q)
    scores = jnp.einsum("bnq,q->bn", temp, q)                 # (B, N)
    pos = jnp.arange(x.shape[1])[None, :]
    scores = jnp.where(pos < clicked_news_length[:, None], scores, -1e9)
    weights = jax.nn.softmax(scores, axis=1)                  # (B, N)
    return jnp.einsum("bn,bnd->bd", weights, x)               # (B, D)


if __name__ == "__main__":
    # Small shapes consistent with the module:
    #   batch B=2, num clicked news N=8, num_filters D=32, query_vector_dim Q=16
    B, N, D, Q = 2, 8, 32, 16

    key = jax.random.PRNGKey(0)
    k1, k2, k3, k4 = jax.random.split(key, 4)

    clicked_news_vector = jax.random.normal(k1, (B, N, D), dtype=jnp.float32)
    clicked_news_length = jnp.array([5, 8], dtype=jnp.int32)

    # Deterministic parameter init (shapes per AdditiveAttention(Q, D)):
    w = jax.random.uniform(k2, (Q, D), minval=-0.1, maxval=0.1, dtype=jnp.float32)
    b = jax.random.uniform(k3, (Q,), minval=-0.1, maxval=0.1, dtype=jnp.float32)
    q = jax.random.uniform(k4, (Q,), minval=-0.1, maxval=0.1, dtype=jnp.float32)

    out = user_encoder_forward(clicked_news_vector, clicked_news_length, w, b, q)
    out = jax.block_until_ready(out)

    ref = user_encoder_reference(clicked_news_vector, clicked_news_length, w, b, q)
    assert out.shape == (B, D)
    # tolerance accommodates MXU f32 multipass vs XLA default-precision reference
    assert jnp.allclose(out, ref, atol=2e-3, rtol=2e-3), (
        float(jnp.max(jnp.abs(out - ref))))

    print("KERNEL_OK")
</pallas_src>

<mosaic_0001>
module attributes {stable_mosaic.version = 11 : i64} {
  func.func @_user_encoder_kernel(%arg0: i32, %arg1: memref<2x1xi32, #tpu.memory_space<vmem>>, %arg2: memref<2x256xf32, #tpu.memory_space<vmem>>, %arg3: memref<256x128xf32, #tpu.memory_space<vmem>>, %arg4: memref<1x128xf32, #tpu.memory_space<vmem>>, %arg5: memref<128x8xf32, #tpu.memory_space<vmem>>, %arg6: memref<8x256xf32, #tpu.memory_space<vmem>>, %arg7: memref<256x32xf32, #tpu.memory_space<vmem>>, %arg8: memref<2x32xf32, #tpu.memory_space<vmem>>) attributes {dimension_semantics = [#tpu.dimension_semantics<parallel>], iteration_bounds = array<i64: 1>, scalar_prefetch = 0 : i64, scratch_operands = 0 : i64, tpu.core_type = #tpu.core_type<tc>, window_params = [{transform_indices = @transform_0, window_bounds = array<i64: 2, 1>}, {transform_indices = @transform_1, window_bounds = array<i64: 2, 256>}, {pipeline_mode = #tpu.pipeline_mode<synchronous>, transform_indices = @transform_2, window_bounds = array<i64: 256, 128>}, {pipeline_mode = #tpu.pipeline_mode<synchronous>, transform_indices = @transform_3, window_bounds = array<i64: 1, 128>}, {pipeline_mode = #tpu.pipeline_mode<synchronous>, transform_indices = @transform_4, window_bounds = array<i64: 128, 8>}, {pipeline_mode = #tpu.pipeline_mode<synchronous>, transform_indices = @transform_5, window_bounds = array<i64: 8, 256>}, {pipeline_mode = #tpu.pipeline_mode<synchronous>, transform_indices = @transform_6, window_bounds = array<i64: 256, 32>}, {transform_indices = @transform_7, window_bounds = array<i64: 2, 32>}]} {
    %c0 = arith.constant 0 : index
    %c0_0 = arith.constant 0 : index
    %0 = vector.load %arg2[%c0, %c0_0] : memref<2x256xf32, #tpu.memory_space<vmem>>, vector<2x256xf32>
    %c0_1 = arith.constant 0 : index
    %c0_2 = arith.constant 0 : index
    %1 = vector.load %arg3[%c0_1, %c0_2] : memref<256x128xf32, #tpu.memory_space<vmem>>, vector<256x128xf32>
    %cst = arith.constant dense<0.000000e+00> : vector<2x128xf32>
    %2 = tpu.matmul %0, %1, %cst {dimension_numbers = #tpu.dot_dimension_numbers<[1], [0], [0], [1], [0, 0, 1, 1], [], []>} : vector<2x256xf32>, vector<256x128xf32>, vector<2x128xf32> -> vector<2x128xf32>
    %c0_3 = arith.constant 0 : index
    %c0_4 = arith.constant 0 : index
    %3 = vector.load %arg4[%c0_3, %c0_4] : memref<1x128xf32, #tpu.memory_space<vmem>>, vector<1x128xf32>
    %4 = vector.broadcast %3 : vector<1x128xf32> to vector<2x128xf32>
    %5 = arith.addf %2, %4 : vector<2x128xf32>
    %6 = math.tanh %5 : vector<2x128xf32>
    %c0_5 = arith.constant 0 : index
    %c0_6 = arith.constant 0 : index
    %7 = vector.load %arg5[%c0_5, %c0_6] : memref<128x8xf32, #tpu.memory_space<vmem>>, vector<128x8xf32>
    %cst_7 = arith.constant dense<0.000000e+00> : vector<2x8xf32>
    %8 = tpu.matmul %6, %7, %cst_7 {dimension_numbers = #tpu.dot_dimension_numbers<[1], [0], [0], [1], [0, 0, 1, 1], [], []>} : vector<2x128xf32>, vector<128x8xf32>, vector<2x8xf32> -> vector<2x8xf32>
    %9 = tpu.iota {dimensions = array<i32: 1>} : vector<2x8xi32>
    %c0_8 = arith.constant 0 : index
    %c0_9 = arith.constant 0 : index
    %10 = vector.load %arg1[%c0_8, %c0_9] : memref<2x1xi32, #tpu.memory_space<vmem>>, vector<2x1xi32>
    %11 = vector.broadcast %10 : vector<2x1xi32> to vector<2x8xi32>
    %12 = arith.cmpi slt, %9, %11 : vector<2x8xi32>
    %cst_10 = arith.constant -1.000000e+09 : f32
    %13 = vector.broadcast %cst_10 : f32 to vector<2x8xf32>
    %14 = arith.select %12, %8, %13 : vector<2x8xi1>, vector<2x8xf32>
    %cst_11 = arith.constant dense<0xFF800000> : vector<2xf32>
    %15 = vector.multi_reduction <maximumf>, %14, %cst_11 [1] : vector<2x8xf32> to vector<2xf32>
    %16 = vector.shape_cast %15 : vector<2xf32> to vector<2x1xf32>
    %17 = vector.broadcast %16 : vector<2x1xf32> to vector<2x8xf32>
    %18 = arith.subf %14, %17 : vector<2x8xf32>
    %19 = math.exp %18 : vector<2x8xf32>
    %cst_12 = arith.constant dense<0.000000e+00> : vector<2xf32>
    %20 = vector.multi_reduction <add>, %19, %cst_12 [1] : vector<2x8xf32> to vector<2xf32>
    %21 = vector.shape_cast %20 : vector<2xf32> to vector<2x1xf32>
    %c0_13 = arith.constant 0 : index
    %c0_14 = arith.constant 0 : index
    %22 = vector.load %arg6[%c0_13, %c0_14] : memref<8x256xf32, #tpu.memory_space<vmem>>, vector<8x256xf32>
    %cst_15 = arith.constant dense<0.000000e+00> : vector<2x256xf32>
    %23 = tpu.matmul %19, %22, %cst_15 {dimension_numbers = #tpu.dot_dimension_numbers<[1], [0], [0], [1], [0, 0, 1, 1], [], []>} : vector<2x8xf32>, vector<8x256xf32>, vector<2x256xf32> -> vector<2x256xf32>
    %c0_16 = arith.constant 0 : index
    %c0_17 = arith.constant 0 : index
    %24 = vector.load %arg2[%c0_16, %c0_17] : memref<2x256xf32, #tpu.memory_space<vmem>>, vector<2x256xf32>
    %25 = arith.mulf %24, %23 : vector<2x256xf32>
    %c0_18 = arith.constant 0 : index
    %c0_19 = arith.constant 0 : index
    %26 = vector.load %arg7[%c0_18, %c0_19] : memref<256x32xf32, #tpu.memory_space<vmem>>, vector<256x32xf32>
    %cst_20 = arith.constant dense<0.000000e+00> : vector<2x32xf32>
    %27 = tpu.matmul %25, %26, %cst_20 {dimension_numbers = #tpu.dot_dimension_numbers<[1], [0], [0], [1], [0, 0, 1, 1], [], []>} : vector<2x256xf32>, vector<256x32xf32>, vector<2x32xf32> -> vector<2x32xf32>
    %28 = tpu.reciprocal %21 : vector<2x1xf32> -> vector<2x1xf32>
    %29 = vector.broadcast %28 : vector<2x1xf32> to vector<2x32xf32>
    %30 = arith.mulf %27, %29 : vector<2x32xf32>
    %c0_21 = arith.constant 0 : index
    %c0_22 = arith.constant 0 : index
    %31 = vector.load %arg8[%c0_21, %c0_22] : memref<2x32xf32, #tpu.memory_space<vmem>>, vector<2x32xf32>
    tpu.vector_store %arg8[%c0_21, %c0_22], %30 {strides = array<i32>} : memref<2x32xf32, #tpu.memory_space<vmem>>, vector<2x32xf32>,
    return
  }
  func.func @transform_0(%arg0: i32) -> (i32, i32) {
    %c0_i32 = arith.constant 0 : i32
    %c0_i32_0 = arith.constant 0 : i32
    return %arg0, %c0_i32 : i32, i32
  }
  func.func @transform_1(%arg0: i32) -> (i32, i32) {
    %c0_i32 = arith.constant 0 : i32
    %c0_i32_0 = arith.constant 0 : i32
    return %arg0, %c0_i32 : i32, i32
  }
  func.func @transform_2(%arg0: i32) -> (i32, i32) {
    %c0_i32 = arith.constant 0 : i32
    %c0_i32_0 = arith.constant 0 : i32
    %c0_i32_1 = arith.constant 0 : i32
    return %c0_i32, %c0_i32_0 : i32, i32
  }
  func.func @transform_3(%arg0: i32) -> (i32, i32) {
    %c0_i32 = arith.constant 0 : i32
    %c0_i32_0 = arith.constant 0 : i32
    %c0_i32_1 = arith.constant 0 : i32
    return %c0_i32, %c0_i32_0 : i32, i32
  }
  func.func @transform_4(%arg0: i32) -> (i32, i32) {
    %c0_i32 = arith.constant 0 : i32
    %c0_i32_0 = arith.constant 0 : i32
    %c0_i32_1 = arith.constant 0 : i32
    return %c0_i32, %c0_i32_0 : i32, i32
  }
  func.func @transform_5(%arg0: i32) -> (i32, i32) {
    %c0_i32 = arith.constant 0 : i32
    %c0_i32_0 = arith.constant 0 : i32
    %c0_i32_1 = arith.constant 0 : i32
    return %c0_i32, %c0_i32_0 : i32, i32
  }
  func.func @transform_6(%arg0: i32) -> (i32, i32) {
    %c0_i32 = arith.constant 0 : i32
    %c0_i32_0 = arith.constant 0 : i32
    %c0_i32_1 = arith.constant 0 : i32
    return %c0_i32, %c0_i32_0 : i32, i32
  }
  func.func @transform_7(%arg0: i32) -> (i32, i32) {
    %c0_i32 = arith.constant 0 : i32
    %c0_i32_0 = arith.constant 0 : i32
    return %arg0, %c0_i32 : i32, i32
  }
}

</mosaic_0001>

<llo_original>
// kernel: tpu_custom_call.1
$region0: #{tpu_custom_call.1}
  #allocation0 [shape = 'u32[]', space=smem, size = 0x4, offset = 0x4, fixed_abs, tag = 'smem constant byte address 0x4 - core index']
  #allocation1 [shape = 'u32[72,128]{1,0:T(1,128)}', space=vmem, size = 0x9000, scoped, tag = 'internal scratch']
  %s0 = inlined_call_operand.vmem [shape: s32[2,1], index: 0, kind: input, shape index: {}]
  %s1 = inlined_call_operand.vmem [shape: f32[2,256], index: 1, kind: input, shape index: {}]
  %s2 = inlined_call_operand.vmem [shape: f32[256,128], index: 2, kind: input, shape index: {}]
  %s3 = inlined_call_operand.vmem [shape: f32[1,128], index: 3, kind: input, shape index: {}]
  %s4 = inlined_call_operand.vmem [shape: f32[128,8], index: 4, kind: input, shape index: {}]
  %s5 = inlined_call_operand.vmem [shape: f32[8,256], index: 5, kind: input, shape index: {}]
  %s6 = inlined_call_operand.vmem [shape: f32[256,32], index: 6, kind: input, shape index: {}]
  %s7 = inlined_call_operand.hbm [shape: f32[2,32], index: 7, kind: output, shape index: {}]
  %s8 = sld [smem:[#allocation0]]
  $region38: #{tpu_custom_call.1} parent=0
    _
  %s10 = ssub.s32 1, %s8
  %s11 = scalar_select 0, %s10, %s8
  $region1: #{tpu_custom_call.1} parent=0
    #allocation2 [shape = 'u8[1024]{0}', space=vmem, size = 0x400, scoped, tag = 'output window, operand 0, single buffered']
    #allocation3 [shape = 's32[1]{0}', space=sflag, size = 0x4, scoped, tag = 'scoped memory for tpu_custom_call.1']
    %12 = vsyncpa [#allocation3], 0
    // Predicated region
    $region2: #{tpu_custom_call.1} parent=1 // pred_check
      _
    $region3: #{tpu_custom_call.1} parent=1 // pred_check_branch
      %14 = sbr.rel (0) target = $region5
    $region4: #{tpu_custom_call.1} parent=1 // pred_region
      _
    $region5: #{tpu_custom_call.1} parent=1 // pred_fallthru
      _
    // Predicated region
    $region6: #{tpu_custom_call.1} parent=1 // pred_check
      _
    $region7: #{tpu_custom_call.1} parent=1 // pred_check_branch
      %16 = sbr.rel (0) target = $region9
    $region8: #{tpu_custom_call.1} parent=1 // pred_region
      _
    $region9: #{tpu_custom_call.1} parent=1 // pred_fallthru
      _
    // Predicated region
    $region10: #{tpu_custom_call.1} parent=1 // pred_check
      _
    $region11: #{tpu_custom_call.1} parent=1 // pred_check_branch
      %18 = sbr.rel (0) target = $region13
    $region12: #{tpu_custom_call.1} parent=1 // pred_region
      _
    $region13: #{tpu_custom_call.1} parent=1 // pred_fallthru
      _
    // Predicated region
    $region14: #{tpu_custom_call.1} parent=1 // pred_check
      _
    $region15: #{tpu_custom_call.1} parent=1 // pred_check_branch
      %20 = sbr.rel (0) target = $region17
    $region16: #{tpu_custom_call.1} parent=1 // pred_region
      _
    $region17: #{tpu_custom_call.1} parent=1 // pred_fallthru
      _
    // Predicated region
    $region18: #{tpu_custom_call.1} parent=1 // pred_check
      _
    $region19: #{tpu_custom_call.1} parent=1 // pred_check_branch
      %22 = sbr.rel (0) target = $region21
    $region20: #{tpu_custom_call.1} parent=1 // pred_region
      _
    $region21: #{tpu_custom_call.1} parent=1 // pred_fallthru
      _
    // Predicated region
    $region22: #{tpu_custom_call.1} parent=1 // pred_check
      _
    $region23: #{tpu_custom_call.1} parent=1 // pred_check_branch
      %24 = sbr.rel (0) target = $region25
    $region24: #{tpu_custom_call.1} parent=1 // pred_region
      _
    $region25: #{tpu_custom_call.1} parent=1 // pred_fallthru
      _
    // Predicated region
    $region26: #{tpu_custom_call.1} parent=1 // pred_check
      _
    $region27: #{tpu_custom_call.1} parent=1 // pred_check_branch
      %26 = sbr.rel (0) target = $region29
    $region28: #{tpu_custom_call.1} parent=1 // pred_region
      _
    $region29: #{tpu_custom_call.1} parent=1 // pred_fallthru
      _
    %v27 = vld [vmem:[%s1] sm:$0xf]
    %v28 = vld [vmem:[%s2] sm:$0xff]
    %v29 = vld [vmem:[%s2 + $0x8] sm:$0xff]
    %v30 = vld [vmem:[%s2 + $0x10] sm:$0xff]
    %v31 = vld [vmem:[%s2 + $0x18] sm:$0xff]
    %v32 = vld [vmem:[%s2 + $0x20] sm:$0xff]
    %v33 = vld [vmem:[%s2 + $0x28] sm:$0xff]
    %v34 = vld [vmem:[%s2 + $0x30] sm:$0xff]
    %v35 = vld [vmem:[%s2 + $0x38] sm:$0xff]
    %v36 = vld [vmem:[%s2 + $0x40] sm:$0xff]
    %v37 = vld [vmem:[%s2 + $0x48] sm:$0xff]
    %v38 = vld [vmem:[%s2 + $0x50] sm:$0xff]
    %v39 = vld [vmem:[%s2 + $0x58] sm:$0xff]
    %v40 = vld [vmem:[%s2 + $0x60] sm:$0xff]
    %v41 = vld [vmem:[%s2 + $0x68] sm:$0xff]
    %v42 = vld [vmem:[%s2 + $0x70] sm:$0xff]
    %v43 = vld [vmem:[%s2 + $0x78] sm:$0xff]
    %v44 = vld [vmem:[%s2 + $0x80] sm:$0xff]
    %v45 = vld [vmem:[%s2 + $0x88] sm:$0xff]
    %v46 = vld [vmem:[%s2 + $0x90] sm:$0xff]
    %v47 = vld [vmem:[%s2 + $0x98] sm:$0xff]
    %v48 = vld [vmem:[%s2 + $0xa0] sm:$0xff]
    %v49 = vld [vmem:[%s2 + $0xa8] sm:$0xff]
    %v50 = vld [vmem:[%s2 + $0xb0] sm:$0xff]
    %v51 = vld [vmem:[%s2 + $0xb8] sm:$0xff]
    %v52 = vld [vmem:[%s2 + $0xc0] sm:$0xff]
    %v53 = vld [vmem:[%s2 + $0xc8] sm:$0xff]
    %v54 = vld [vmem:[%s2 + $0xd0] sm:$0xff]
    %v55 = vld [vmem:[%s2 + $0xd8] sm:$0xff]
    %v56 = vld [vmem:[%s2 + $0xe0] sm:$0xff]
    %v57 = vld [vmem:[%s2 + $0xe8] sm:$0xff]
    %v58 = vld [vmem:[%s2 + $0xf0] sm:$0xff]
    %v59 = vld [vmem:[%s2 + $0xf8] sm:$0xff]
    %v60 = vld [vmem:[%s3] sm:$0x1]
    %v62 = vperm.slane %v60, 0
    %65 = vst [vmem:[#allocation1] ss:$4 sm:$0xff] %v27
    %v66 = vld.sshfl [vmem:[#allocation1] sm:$0xff pattern:$0x73625140]
    %v67 = vld.sshfl [vmem:[#allocation1 + $0x8] sm:$0xff pattern:$0x73625140]
    %70 = vmatpush.msra.mxu0 %v43
    %71 = vmatpush.msra.mxu0 %v42
    %72 = vmatpush.msra.mxu0 %v41
    %73 = vmatpush.msra.mxu0 %v40
    %74 = vmatpush.msra.mxu0 %v39
    %75 = vmatpush.msra.mxu0 %v38
    %76 = vmatpush.msra.mxu0 %v37
    %77 = vmatpush.msra.mxu0 %v36
    %78 = vmatpush.msra.mxu0 %v35
    %79 = vmatpush.msra.mxu0 %v34
    %80 = vmatpush.msra.mxu0 %v33
    %81 = vmatpush.msra.mxu0 %v32
    %82 = vmatpush.msra.mxu0 %v31
    %83 = vmatpush.msra.mxu0 %v30
    %84 = vmatpush.msra.mxu0 %v29
    %85 = vmatpush.msra.mxu0 %v28
    %86 = vmatmul.f32.gmra.mxu0 %v66
    %v87 = vpop.f32.mrf.mxu0
    %v88 = vadd.f32 %v62, %v87
    %89 = vdwg.mxu0
    %90 = vmatpush.msra.mxu0 %v59
    %91 = vmatpush.msra.mxu0 %v58
    %92 = vmatpush.msra.mxu0 %v57
    %93 = vmatpush.msra.mxu0 %v56
    %94 = vmatpush.msra.mxu0 %v55
    %95 = vmatpush.msra.mxu0 %v54
    %96 = vmatpush.msra.mxu0 %v53
    %97 = vmatpush.msra.mxu0 %v52
    %98 = vmatpush.msra.mxu0 %v51
    %99 = vmatpush.msra.mxu0 %v50
    %100 = vmatpush.msra.mxu0 %v49
    %101 = vmatpush.msra.mxu0 %v48
    %102 = vmatpush.msra.mxu0 %v47
    %103 = vmatpush.msra.mxu0 %v46
    %104 = vmatpush.msra.mxu0 %v45
    %105 = vmatpush.msra.mxu0 %v44
    %106 = vmatmul.f32.gmra.mxu0 %v67
    %v107 = vpop.f32.mrf.mxu0
    %v108 = vadd.f32 %v88, %v107
    %109 = vdwg.mxu0
    %v110 = vtanh.pop %v108
    %v111 = vld [vmem:[%s4] sm:$0xff]
    %v112 = vld [vmem:[%s4 + $0x8] sm:$0xff]
    %v113 = vld [vmem:[%s4 + $0x10] sm:$0xff]
    %v114 = vld [vmem:[%s4 + $0x18] sm:$0xff]
    %v115 = vld [vmem:[%s4 + $0x20] sm:$0xff]
    %v116 = vld [vmem:[%s4 + $0x28] sm:$0xff]
    %v117 = vld [vmem:[%s4 + $0x30] sm:$0xff]
    %v118 = vld [vmem:[%s4 + $0x38] sm:$0xff]
    %v119 = vld [vmem:[%s4 + $0x40] sm:$0xff]
    %v120 = vld [vmem:[%s4 + $0x48] sm:$0xff]
    %v121 = vld [vmem:[%s4 + $0x50] sm:$0xff]
    %v122 = vld [vmem:[%s4 + $0x58] sm:$0xff]
    %v123 = vld [vmem:[%s4 + $0x60] sm:$0xff]
    %v124 = vld [vmem:[%s4 + $0x68] sm:$0xff]
    %v125 = vld [vmem:[%s4 + $0x70] sm:$0xff]
    %v126 = vld [vmem:[%s4 + $0x78] sm:$0xff]
    %127 = vmatpush.msra.mxu0 %v126
    %128 = vmatpush.msra.mxu0 %v125
    %129 = vmatpush.msra.mxu0 %v124
    %130 = vmatpush.msra.mxu0 %v123
    %131 = vmatpush.msra.mxu0 %v122
    %132 = vmatpush.msra.mxu0 %v121
    %133 = vmatpush.msra.mxu0 %v120
    %134 = vmatpush.msra.mxu0 %v119
    %135 = vmatpush.msra.mxu0 %v118
    %136 = vmatpush.msra.mxu0 %v117
    %137 = vmatpush.msra.mxu0 %v116
    %138 = vmatpush.msra.mxu0 %v115
    %139 = vmatpush.msra.mxu0 %v114
    %140 = vmatpush.msra.mxu0 %v113
    %141 = vmatpush.msra.mxu0 %v112
    %142 = vmatpush.msra.mxu0 %v111
    %143 = vmatmul.f32.gmra.mxu0 %v110
    %v144 = vpop.f32.mrf.mxu0
    %v145 = vadd.f32 0.0, %v144
    %146 = vdwg.mxu0
    %v147 = vlaneseq
    %v148 = vand.u32 %v147, 127
    %v149 = vld [vmem:[%s0] sm:$0x3]
    %150 = vset.pattern.permute.xlu0 0
    %151 = vperm.xlu0 %150, %v149
    %v152 = vpop.permute.xlu0 %151
    %vm153 = vcmp.lt.s32.totalorder %v148, %v152
    %v154 = vsel %vm153, %v145, -1e+09
    %vm155 = vcmask 58368
    %v156 = vsel %vm155, %v154, -inf
    %157 = vmax.xlane.f32.xlu0 %v156
    %v158 = vpop.xlane.xlu0 %157
    %v159 = vsub.f32 %v154, %v158
    %v160 = vmul.f32 %v159, 1.442695
    %v161 = vpow.pop %v160
    %v162 = vsel %vm155, %v161, 0.0
    %163 = vadd.xlane.f32.xlu0 %v162
    %v164 = vpop.xlane.xlu0 %163
    %v165 = vld [vmem:[%s5] sm:$0xff]
    %v166 = vld [vmem:[%s5 + $0x8] sm:$0xff]
    %vm167 = vcmask 64512
    %v169 = vsel %vm167, %v161, 0
    %171 = vmatpush.msra.mxu0 0.0
    %172 = vmatpush.msra.mxu0 0.0
    %173 = vmatpush.msra.mxu0 0.0
    %174 = vmatpush.msra.mxu0 0.0
    %175 = vmatpush.msra.mxu0 0.0
    %176 = vmatpush.msra.mxu0 0.0
    %177 = vmatpush.msra.mxu0 0.0
    %178 = vmatpush.msra.mxu0 0.0
    %179 = vmatpush.msra.mxu0 0.0
    %180 = vmatpush.msra.mxu0 0.0
    %181 = vmatpush.msra.mxu0 0.0
    %182 = vmatpush.msra.mxu0 0.0
    %183 = vmatpush.msra.mxu0 0.0
    %184 = vmatpush.msra.mxu0 0.0
    %185 = vmatpush.msra.mxu0 0.0
    %186 = vmatpush.msra.mxu0 %v165
    %187 = vmatmul.f32.gmra.mxu0 %v169
    %v188 = vpop.f32.mrf.mxu0
    %v189 = vadd.f32 0.0, %v188
    %190 = vdwg.mxu0
    %191 = vmatpush.msra.mxu0 0.0
    %192 = vmatpush.msra.mxu0 0.0
    %193 = vmatpush.msra.mxu0 0.0
    %194 = vmatpush.msra.mxu0 0.0
    %195 = vmatpush.msra.mxu0 0.0
    %196 = vmatpush.msra.mxu0 0.0
    %197 = vmatpush.msra.mxu0 0.0
    %198 = vmatpush.msra.mxu0 0.0
    %199 = vmatpush.msra.mxu0 0.0
    %200 = vmatpush.msra.mxu0 0.0
    %201 = vmatpush.msra.mxu0 0.0
    %202 = vmatpush.msra.mxu0 0.0
    %203 = vmatpush.msra.mxu0 0.0
    %204 = vmatpush.msra.mxu0 0.0
    %205 = vmatpush.msra.mxu0 0.0
    %206 = vmatpush.msra.mxu0 %v166
    %207 = vmatmul.f32.gmra.mxu0 %v169
    %v208 = vpop.f32.mrf.mxu0
    %v209 = vadd.f32 0.0, %v208
    %210 = vdwg.mxu0
    %v213 = vrot.slane %v209, 6
    %vm214 = vcmask 1041408
    %v215 = vsel %vm214, %v189, %v213
    %v217 = vmul.f32 %v27, %v215
    %v218 = vld [vmem:[%s6] sm:$0xff]
    %v219 = vld [vmem:[%s6 + $0x8] sm:$0xff]
    %v220 = vld [vmem:[%s6 + $0x10] sm:$0xff]
    %v221 = vld [vmem:[%s6 + $0x18] sm:$0xff]
    %v222 = vld [vmem:[%s6 + $0x20] sm:$0xff]
    %v223 = vld [vmem:[%s6 + $0x28] sm:$0xff]
    %v224 = vld [vmem:[%s6 + $0x30] sm:$0xff]
    %v225 = vld [vmem:[%s6 + $0x38] sm:$0xff]
    %v226 = vld [vmem:[%s6 + $0x40] sm:$0xff]
    %v227 = vld [vmem:[%s6 + $0x48] sm:$0xff]
    %v228 = vld [vmem:[%s6 + $0x50] sm:$0xff]
    %v229 = vld [vmem:[%s6 + $0x58] sm:$0xff]
    %v230 = vld [vmem:[%s6 + $0x60] sm:$0xff]
    %v231 = vld [vmem:[%s6 + $0x68] sm:$0xff]
    %v232 = vld [vmem:[%s6 + $0x70] sm:$0xff]
    %v233 = vld [vmem:[%s6 + $0x78] sm:$0xff]
    %v234 = vld [vmem:[%s6 + $0x80] sm:$0xff]
    %v235 = vld [vmem:[%s6 + $0x88] sm:$0xff]
    %v236 = vld [vmem:[%s6 + $0x90] sm:$0xff]
    %v237 = vld [vmem:[%s6 + $0x98] sm:$0xff]
    %v238 = vld [vmem:[%s6 + $0xa0] sm:$0xff]
    %v239 = vld [vmem:[%s6 + $0xa8] sm:$0xff]
    %v240 = vld [vmem:[%s6 + $0xb0] sm:$0xff]
    %v241 = vld [vmem:[%s6 + $0xb8] sm:$0xff]
    %v242 = vld [vmem:[%s6 + $0xc0] sm:$0xff]
    %v243 = vld [vmem:[%s6 + $0xc8] sm:$0xff]
    %v244 = vld [vmem:[%s6 + $0xd0] sm:$0xff]
    %v245 = vld [vmem:[%s6 + $0xd8] sm:$0xff]
    %v246 = vld [vmem:[%s6 + $0xe0] sm:$0xff]
    %v247 = vld [vmem:[%s6 + $0xe8] sm:$0xff]
    %v248 = vld [vmem:[%s6 + $0xf0] sm:$0xff]
    %v249 = vld [vmem:[%s6 + $0xf8] sm:$0xff]
    %251 = vst [vmem:[#allocation1] ss:$4 sm:$0xff] %v217
    %v252 = vld.sshfl [vmem:[#allocation1] sm:$0xff pattern:$0x73625140]
    %v253 = vld.sshfl [vmem:[#allocation1 + $0x8] sm:$0xff pattern:$0x73625140]
    %256 = vmatpush.msra.mxu0 %v233
    %257 = vmatpush.msra.mxu0 %v232
    %258 = vmatpush.msra.mxu0 %v231
    %259 = vmatpush.msra.mxu0 %v230
    %260 = vmatpush.msra.mxu0 %v229
    %261 = vmatpush.msra.mxu0 %v228
    %262 = vmatpush.msra.mxu0 %v227
    %263 = vmatpush.msra.mxu0 %v226
    %264 = vmatpush.msra.mxu0 %v225
    %265 = vmatpush.msra.mxu0 %v224
    %266 = vmatpush.msra.mxu0 %v223
    %267 = vmatpush.msra.mxu0 %v222
    %268 = vmatpush.msra.mxu0 %v221
    %269 = vmatpush.msra.mxu0 %v220
    %270 = vmatpush.msra.mxu0 %v219
    %271 = vmatpush.msra.mxu0 %v218
    %272 = vmatmul.f32.gmra.mxu0 %v252
    %v273 = vpop.f32.mrf.mxu0
    %v274 = vadd.f32 0.0, %v273
    %275 = vdwg.mxu0
    %276 = vmatpush.msra.mxu0 %v249
    %277 = vmatpush.msra.mxu0 %v248
    %278 = vmatpush.msra.mxu0 %v247
    %279 = vmatpush.msra.mxu0 %v246
    %280 = vmatpush.msra.mxu0 %v245
    %281 = vmatpush.msra.mxu0 %v244
    %282 = vmatpush.msra.mxu0 %v243
    %283 = vmatpush.msra.mxu0 %v242
    %284 = vmatpush.msra.mxu0 %v241
    %285 = vmatpush.msra.mxu0 %v240
    %286 = vmatpush.msra.mxu0 %v239
    %287 = vmatpush.msra.mxu0 %v238
    %288 = vmatpush.msra.mxu0 %v237
    %289 = vmatpush.msra.mxu0 %v236
    %290 = vmatpush.msra.mxu0 %v235
    %291 = vmatpush.msra.mxu0 %v234
    %292 = vmatmul.f32.gmra.mxu0 %v253
    %v293 = vpop.f32.mrf.mxu0
    %v294 = vadd.f32 %v274, %v293
    %295 = vdwg.mxu0
    %v296 = vrcp.pop %v164
    %v297 = vmul.f32 %v164, %v296
    %v298 = vsub.f32 1.0, %v297
    %v299 = vmul.f32 %v296, %v298
    %v300 = vadd.f32 %v296, %v299
    %vm301 = vweird.f32 %v164
    %vm302 = vweird.f32 %v296
    %vm303 = vmor %vm301, %vm302
    %v304 = vsel %vm303, %v296, %v300
    %v305 = vand.u32 2147483647, %v164
    %vm306 = vcmp.eq.f32.partialorder %v305, 8.507059e+37
    %v307 = vand.u32 %v164, 2147483648
    %v308 = vor.u32 1.1754944e-38, %v307
    %v309 = vsel %vm306, %v308, %v304
    %v310 = vmul.f32 %v294, %v309
    %vm311 = vcmask 254976
    %312 = vst.msk [vmem:[#allocation2] sm:$0x3] %vm311, %v310
    // Predicated region
    $region30: #{tpu_custom_call.1} parent=1 // pred_check
      _
    $region31: #{tpu_custom_call.1} parent=1 // pred_check_branch
      %314 = sbr.rel (0) target = $region33
    $region32: #{tpu_custom_call.1} parent=1 // pred_region
      %316 = vsyncadd [#allocation3], 0
      %s318 = sshll.u32 [#allocation2], 4
      %s319 = int_to_ptr.vmem [resolvable:$true] %s318
      %s320 = sshll.u32 %s7, 4
      %s321 = int_to_ptr.hbm [resolvable:$true] %s320
      %323 = dma.vmem_to_hbm [thread:$0]  %s319, 32, %s321, [#allocation3]
    $region33: #{tpu_custom_call.1} parent=1 // pred_fallthru
      _
    // Predicated region
    $region34: #{tpu_custom_call.1} parent=1 // pred_check
      _
    $region35: #{tpu_custom_call.1} parent=1 // pred_check_branch
      %325 = sbr.rel (0) target = $region37
    $region36: #{tpu_custom_call.1} parent=1 // pred_region
      %327 = dma.done [#allocation3], 32
    $region37: #{tpu_custom_call.1} parent=1 // pred_fallthru
      _
    %328 = vsyncpa [#allocation3], 1

</llo_original>
